<compile_context>
chip_gen: v6e
topology: v6e:2x2x1
jax: 0.10.0
libtpu: 0.0.40
codegen_flags: <defaults>
</compile_context>

<pallas_src>
import jax
import jax.numpy as jnp
from jax.experimental import pallas as pl
from jax.experimental.pallas import tpu as pltpu


# ----------------------------- Pallas kernel --------------------------------
def encoder_gru_seq_kernel(ids_ref,            # (T,) int32 in SMEM (scalar prefetch)
                           emb_ref,            # (1, 1, H) bf16   gathered embedding row
                           h0_ref,             # (1, H)    f32    initial hidden (resident)
                           wih_ref, whh_ref,   # (H, 3H)   bf16   resident GRU weights
                           bih_ref, bhh_ref,   # (1, 3H)   f32    resident biases
                           out_ref,            # (1, 1, H) f32    per-step hidden out
                           h_scratch):         # (1, H)    f32    VMEM carry
    H = h_scratch.shape[-1]
    t = pl.program_id(0)

    @pl.when(t == 0)
    def _():
        h_scratch[...] = h0_ref[...]

    x = emb_ref[0]               # (1, H) bf16 embedded token for this step
    h = h_scratch[...]           # (1, H) f32 carried hidden

    # Input / hidden projections on the MXU with f32 accumulation.
    gi = jnp.dot(x, wih_ref[...], preferred_element_type=jnp.float32) + bih_ref[...]
    gh = jnp.dot(h.astype(whh_ref.dtype), whh_ref[...],
                 preferred_element_type=jnp.float32) + bhh_ref[...]

    # Lane-aligned static gate slices (PyTorch nn.GRU order: r, z, n).
    r = jax.nn.sigmoid(gi[:, 0:H] + gh[:, 0:H])
    z = jax.nn.sigmoid(gi[:, H:2 * H] + gh[:, H:2 * H])
    n = jnp.tanh(gi[:, 2 * H:3 * H] + r * gh[:, 2 * H:3 * H])

    h_new = (1.0 - z) * n + z * h          # f32 elementwise (v5e-friendly)
    h_scratch[...] = h_new
    out_ref[0] = h_new.astype(out_ref.dtype)


# ------------------------------ wrappers -------------------------------------
def encoder_encode_sequence(params, token_ids, hidden):
    """Run the GRU over a whole token sequence with weights resident in VMEM.

    token_ids: (T,) int32
    hidden:    (1, 1, H) f32
    returns (outputs, hidden): outputs (T, 1, H); hidden (1, 1, H) == outputs[-1]
    """
    H = hidden.shape[-1]
    T = token_ids.shape[0]
    h0 = hidden.reshape(1, H).astype(jnp.float32)

    grid_spec = pltpu.PrefetchScalarGridSpec(
        num_scalar_prefetch=1,
        grid=(T,),
        in_specs=[
            # embedding row gather driven by the scalar-prefetched token ids
            pl.BlockSpec((1, 1, H), lambda t, ids: (ids[t], 0, 0)),
            # everything below maps to the same block every step -> stays in VMEM
            pl.BlockSpec((1, H), lambda t, ids: (0, 0)),            # h0
            pl.BlockSpec((H, 3 * H), lambda t, ids: (0, 0)),        # w_ih_t
            pl.BlockSpec((H, 3 * H), lambda t, ids: (0, 0)),        # w_hh_t
            pl.BlockSpec((1, 3 * H), lambda t, ids: (0, 0)),        # b_ih
            pl.BlockSpec((1, 3 * H), lambda t, ids: (0, 0)),        # b_hh
        ],
        out_specs=pl.BlockSpec((1, 1, H), lambda t, ids: (t, 0, 0)),
        scratch_shapes=[pltpu.VMEM((1, H), jnp.float32)],
    )

    outputs = pl.pallas_call(
        encoder_gru_seq_kernel,
        out_shape=jax.ShapeDtypeStruct((T, 1, H), jnp.float32),
        grid_spec=grid_spec,
        compiler_params=pltpu.CompilerParams(
            # recurrence over time -> "arbitrary"
            dimension_semantics=("arbitrary",),
            # explicit budget: bf16 resident weights at padded H=1152 (~16 MiB) fit
            # with headroom on v5e (16 MiB default scoped) and v7x (64 MiB physical).
            vmem_limit_bytes=48 * 1024 * 1024,
        ),
    )(token_ids.astype(jnp.int32), params["embedding"], h0,
      params["w_ih_t"], params["w_hh_t"], params["b_ih"], params["b_hh"])

    final_hidden = outputs[-1].reshape(1, 1, H)
    return outputs, final_hidden


def encoder_forward(params, token_id, hidden):
    """Equivalent of Encoder.forward(input, hidden) for a single token.

    token_id: int32 scalar; hidden: (1, 1, H) f32
    returns (output, hidden), each (1, 1, H); output == new hidden (single-step GRU).
    """
    H = hidden.shape[-1]
    token_ids = jnp.asarray(token_id, jnp.int32).reshape(1)
    outputs, new_hidden = encoder_encode_sequence(params, token_ids, hidden)
    out = outputs.reshape(1, 1, H)
    return out, new_hidden


def init_hidden(hidden_size):
    return jnp.zeros((1, 1, hidden_size), jnp.float32)


def init_encoder_params(key, input_size, hidden_size):
    """Deterministic parameter init mirroring nn.Embedding / nn.GRU shapes.

    hidden_size must be a multiple of 128 so gate slices and stores are
    lane-aligned (the real model's 1028 should be padded to 1152).
    """
    assert hidden_size % 128 == 0, "pad hidden_size to a multiple of 128"
    k_emb, k_wih, k_whh, k_bih, k_bhh = jax.random.split(key, 5)
    bound = 1.0 / jnp.sqrt(hidden_size)
    return {
        # (V, 1, H): last two dims match the gathered (1, 1, H) block.
        "embedding": jax.random.normal(
            k_emb, (input_size, 1, hidden_size), jnp.float32).astype(jnp.bfloat16),
        # nn.GRU weights, pre-transposed for x @ W: (H, 3H), stored bf16.
        "w_ih_t": jax.random.uniform(
            k_wih, (hidden_size, 3 * hidden_size), jnp.float32,
            -bound, bound).astype(jnp.bfloat16),
        "w_hh_t": jax.random.uniform(
            k_whh, (hidden_size, 3 * hidden_size), jnp.float32,
            -bound, bound).astype(jnp.bfloat16),
        "b_ih": jax.random.uniform(
            k_bih, (1, 3 * hidden_size), jnp.float32, -bound, bound),
        "b_hh": jax.random.uniform(
            k_bhh, (1, 3 * hidden_size), jnp.float32, -bound, bound),
    }


# ------------------------------ reference ------------------------------------
def _gru_step_ref(x_bf16, h_f32, w_ih_t, w_hh_t, b_ih, b_hh):
    H = h_f32.shape[-1]
    gi = jnp.dot(x_bf16, w_ih_t, preferred_element_type=jnp.float32) + b_ih
    gh = jnp.dot(h_f32.astype(w_hh_t.dtype), w_hh_t,
                 preferred_element_type=jnp.float32) + b_hh
    r = jax.nn.sigmoid(gi[:, :H] + gh[:, :H])
    z = jax.nn.sigmoid(gi[:, H:2 * H] + gh[:, H:2 * H])
    n = jnp.tanh(gi[:, 2 * H:] + r * gh[:, 2 * H:])
    return (1.0 - z) * n + z * h_f32


def encoder_ref(params, token_ids, hidden):
    H = hidden.shape[-1]
    h = hidden.reshape(1, H)
    outs = []
    for t in range(token_ids.shape[0]):
        x = params["embedding"][token_ids[t]].reshape(1, H)
        h = _gru_step_ref(x, h, params["w_ih_t"], params["w_hh_t"],
                          params["b_ih"], params["b_hh"])
        outs.append(h)
    return jnp.stack(outs, axis=0), h.reshape(1, 1, H)


# --------------------------------- demo ---------------------------------------
if __name__ == "__main__":
    # Small shapes consistent with the module (real model: V~230, H=1028 -> pad 1152).
    VOCAB = 64
    HIDDEN = 128     # multiple of 128 for lane-aligned gate slices / unmasked stores
    SEQ = 8

    key = jax.random.PRNGKey(0)
    params = init_encoder_params(key, VOCAB, HIDDEN)

    token_ids = jax.random.randint(jax.random.PRNGKey(1), (SEQ,), 0, VOCAB, jnp.int32)
    hidden = init_hidden(HIDDEN)

    encode_seq = jax.jit(encoder_encode_sequence)
    step = jax.jit(encoder_forward)

    # Sequence-level encode: weights stay resident in VMEM across all T steps.
    outputs, new_hidden = encode_seq(params, token_ids, hidden)
    outputs = jax.block_until_ready(outputs)
    new_hidden = jax.block_until_ready(new_hidden)
    assert outputs.shape == (SEQ, 1, HIDDEN)
    assert new_hidden.shape == (1, 1, HIDDEN)

    # Single-step API matching Encoder.forward(input, hidden).
    out1, h1 = step(params, token_ids[0], hidden)
    out1 = jax.block_until_ready(out1)
    assert out1.shape == (1, 1, HIDDEN) and h1.shape == (1, 1, HIDDEN)

    # Cross-check against a pure-JAX reference (bf16 weights -> loosened tolerance).
    ref_outputs, ref_hidden = encoder_ref(params, token_ids, hidden)
    ref_outputs = ref_outputs.reshape(SEQ, 1, HIDDEN)
    assert jnp.allclose(outputs, ref_outputs, atol=1e-2, rtol=1e-2), \
        float(jnp.max(jnp.abs(outputs - ref_outputs)))
    assert jnp.allclose(new_hidden, ref_hidden, atol=1e-2, rtol=1e-2)
    assert jnp.allclose(out1, ref_outputs[0:1].reshape(1, 1, HIDDEN), atol=1e-2, rtol=1e-2)

    # Iterating the single-step API reproduces the sequence kernel (hidden-carry check).
    h = hidden
    for t in range(SEQ):
        _, h = step(params, token_ids[t], h)
    h = jax.block_until_ready(h)
    assert jnp.allclose(h, new_hidden, atol=1e-2, rtol=1e-2)

    # TODO(synk): if multiple sequences are ever decoded together, batch the activation
    # rows (B>=8) and mark a parallel batch grid axis so v7x's 2 TensorCores split it.
    print("KERNEL_OK")
</pallas_src>

<mosaic_0001>
module attributes {stable_mosaic.version = 11 : i64} {
  func.func @encoder_gru_seq_kernel(%arg0: i32, %arg1: memref<8xi32, #tpu.memory_space<smem>>, %arg2: memref<1x1x128xbf16, #tpu.memory_space<vmem>>, %arg3: memref<1x128xf32, #tpu.memory_space<vmem>>, %arg4: memref<128x384xbf16, #tpu.memory_space<vmem>>, %arg5: memref<128x384xbf16, #tpu.memory_space<vmem>>, %arg6: memref<1x384xf32, #tpu.memory_space<vmem>>, %arg7: memref<1x384xf32, #tpu.memory_space<vmem>>, %arg8: memref<1x1x128xf32, #tpu.memory_space<vmem>>, %arg9: memref<1x128xf32, #tpu.memory_space<vmem>>) attributes {dimension_semantics = [#tpu.dimension_semantics<arbitrary>], iteration_bounds = array<i64: 8>, scalar_prefetch = 1 : i64, scratch_operands = 1 : i64, tpu.core_type = #tpu.core_type<tc>, window_params = [{transform_indices = @transform_0, window_bounds = array<i64: 1, 1, 128>}, {pipeline_mode = #tpu.pipeline_mode<synchronous>, transform_indices = @transform_1, window_bounds = array<i64: 1, 128>}, {pipeline_mode = #tpu.pipeline_mode<synchronous>, transform_indices = @transform_2, window_bounds = array<i64: 128, 384>}, {pipeline_mode = #tpu.pipeline_mode<synchronous>, transform_indices = @transform_3, window_bounds = array<i64: 128, 384>}, {pipeline_mode = #tpu.pipeline_mode<synchronous>, transform_indices = @transform_4, window_bounds = array<i64: 1, 384>}, {pipeline_mode = #tpu.pipeline_mode<synchronous>, transform_indices = @transform_5, window_bounds = array<i64: 1, 384>}, {transform_indices = @transform_6, window_bounds = array<i64: 1, 1, 128>}]} {
    %c0_i32 = arith.constant 0 : i32
    %0 = arith.cmpi eq, %arg0, %c0_i32 : i32
    %1 = arith.extui %0 : i1 to i32
    %c0_i32_0 = arith.constant 0 : i32
    %2 = arith.cmpi ne, %1, %c0_i32_0 : i32
    scf.if %2 {
      %c0_22 = arith.constant 0 : index
      %c0_23 = arith.constant 0 : index
      %45 = vector.load %arg3[%c0_22, %c0_23] : memref<1x128xf32, #tpu.memory_space<vmem>>, vector<1x128xf32>
      %c0_24 = arith.constant 0 : index
      %c0_25 = arith.constant 0 : index
      %46 = vector.load %arg9[%c0_24, %c0_25] : memref<1x128xf32, #tpu.memory_space<vmem>>, vector<1x128xf32>
      tpu.vector_store %arg9[%c0_24, %c0_25], %45 {strides = array<i32>} : memref<1x128xf32, #tpu.memory_space<vmem>>, vector<1x128xf32>,
    } else {
    }
    %c0 = arith.constant 0 : index
    %c0_1 = arith.constant 0 : index
    %c0_2 = arith.constant 0 : index
    %3 = vector.load %arg2[%c0, %c0_1, %c0_2] : memref<1x1x128xbf16, #tpu.memory_space<vmem>>, vector<1x1x128xbf16>
    %4 = vector.shape_cast %3 : vector<1x1x128xbf16> to vector<1x128xbf16>
    %c0_3 = arith.constant 0 : index
    %c0_4 = arith.constant 0 : index
    %5 = vector.load %arg9[%c0_3, %c0_4] : memref<1x128xf32, #tpu.memory_space<vmem>>, vector<1x128xf32>
    %c0_5 = arith.constant 0 : index
    %c0_6 = arith.constant 0 : index
    %6 = vector.load %arg4[%c0_5, %c0_6] : memref<128x384xbf16, #tpu.memory_space<vmem>>, vector<128x384xbf16>
    %cst = arith.constant dense<0.000000e+00> : vector<1x384xf32>
    %7 = tpu.matmul %4, %6, %cst {dimension_numbers = #tpu.dot_dimension_numbers<[1], [0], [0], [1], [0, 0, 1, 1], [], []>} : vector<1x128xbf16>, vector<128x384xbf16>, vector<1x384xf32> -> vector<1x384xf32>
    %c0_7 = arith.constant 0 : index
    %c0_8 = arith.constant 0 : index
    %8 = vector.load %arg6[%c0_7, %c0_8] : memref<1x384xf32, #tpu.memory_space<vmem>>, vector<1x384xf32>
    %9 = arith.addf %7, %8 : vector<1x384xf32>
    %10 = arith.truncf %5 : vector<1x128xf32> to vector<1x128xbf16>
    %c0_9 = arith.constant 0 : index
    %c0_10 = arith.constant 0 : index
    %11 = vector.load %arg5[%c0_9, %c0_10] : memref<128x384xbf16, #tpu.memory_space<vmem>>, vector<128x384xbf16>
    %cst_11 = arith.constant dense<0.000000e+00> : vector<1x384xf32>
    %12 = tpu.matmul %10, %11, %cst_11 {dimension_numbers = #tpu.dot_dimension_numbers<[1], [0], [0], [1], [0, 0, 1, 1], [], []>} : vector<1x128xbf16>, vector<128x384xbf16>, vector<1x384xf32> -> vector<1x384xf32>
    %c0_12 = arith.constant 0 : index
    %c0_13 = arith.constant 0 : index
    %13 = vector.load %arg7[%c0_12, %c0_13] : memref<1x384xf32, #tpu.memory_space<vmem>>, vector<1x384xf32>
    %14 = arith.addf %12, %13 : vector<1x384xf32>
    %15 = vector.extract_strided_slice %9 {offsets = [0, 0], sizes = [1, 128], strides = [1, 1]} : vector<1x384xf32> to vector<1x128xf32>
    %16 = vector.extract_strided_slice %14 {offsets = [0, 0], sizes = [1, 128], strides = [1, 1]} : vector<1x384xf32> to vector<1x128xf32>
    %17 = arith.addf %15, %16 : vector<1x128xf32>
    %18 = arith.negf %17 : vector<1x128xf32>
    %19 = math.exp %18 : vector<1x128xf32>
    %cst_14 = arith.constant 1.000000e+00 : f32
    %20 = vector.broadcast %cst_14 : f32 to vector<1x128xf32>
    %21 = arith.addf %20, %19 : vector<1x128xf32>
    %22 = arith.divf %20, %21 : vector<1x128xf32>
    %23 = vector.extract_strided_slice %9 {offsets = [0, 128], sizes = [1, 128], strides = [1, 1]} : vector<1x384xf32> to vector<1x128xf32>
    %24 = vector.extract_strided_slice %14 {offsets = [0, 128], sizes = [1, 128], strides = [1, 1]} : vector<1x384xf32> to vector<1x128xf32>
    %25 = arith.addf %23, %24 : vector<1x128xf32>
    %26 = arith.negf %25 : vector<1x128xf32>
    %27 = math.exp %26 : vector<1x128xf32>
    %cst_15 = arith.constant 1.000000e+00 : f32
    %28 = vector.broadcast %cst_15 : f32 to vector<1x128xf32>
    %29 = arith.addf %28, %27 : vector<1x128xf32>
    %30 = arith.divf %28, %29 : vector<1x128xf32>
    %31 = vector.extract_strided_slice %9 {offsets = [0, 256], sizes = [1, 128], strides = [1, 1]} : vector<1x384xf32> to vector<1x128xf32>
    %32 = vector.extract_strided_slice %14 {offsets = [0, 256], sizes = [1, 128], strides = [1, 1]} : vector<1x384xf32> to vector<1x128xf32>
    %33 = arith.mulf %22, %32 : vector<1x128xf32>
    %34 = arith.addf %31, %33 : vector<1x128xf32>
    %35 = math.tanh %34 : vector<1x128xf32>
    %cst_16 = arith.constant 1.000000e+00 : f32
    %36 = vector.broadcast %cst_16 : f32 to vector<1x128xf32>
    %37 = arith.subf %36, %30 : vector<1x128xf32>
    %38 = arith.mulf %37, %35 : vector<1x128xf32>
    %39 = arith.mulf %30, %5 : vector<1x128xf32>
    %40 = arith.addf %38, %39 : vector<1x128xf32>
    %c0_17 = arith.constant 0 : index
    %c0_18 = arith.constant 0 : index
    %41 = vector.load %arg9[%c0_17, %c0_18] : memref<1x128xf32, #tpu.memory_space<vmem>>, vector<1x128xf32>
    tpu.vector_store %arg9[%c0_17, %c0_18], %40 {strides = array<i32>} : memref<1x128xf32, #tpu.memory_space<vmem>>, vector<1x128xf32>,
    %c0_19 = arith.constant 0 : index
    %c0_20 = arith.constant 0 : index
    %c0_21 = arith.constant 0 : index
    %42 = vector.load %arg8[%c0_19, %c0_20, %c0_21] : memref<1x1x128xf32, #tpu.memory_space<vmem>>, vector<1x1x128xf32>
    %43 = vector.shape_cast %42 : vector<1x1x128xf32> to vector<1x128xf32>
    %44 = vector.shape_cast %40 : vector<1x128xf32> to vector<1x1x128xf32>
    tpu.vector_store %arg8[%c0_19, %c0_20, %c0_21], %44 {strides = array<i32>} : memref<1x1x128xf32, #tpu.memory_space<vmem>>, vector<1x1x128xf32>,
    return
  }
  func.func @transform_0(%arg0: i32, %arg1: memref<8xi32, #tpu.memory_space<smem>>) -> (i32, i32, i32) {
    %0 = arith.index_cast %arg0 : i32 to index
    %1 = memref.load %arg1[%0] : memref<8xi32, #tpu.memory_space<smem>>
    %c0_i32 = arith.constant 0 : i32
    %c0_i32_0 = arith.constant 0 : i32
    %c0_i32_1 = arith.constant 0 : i32
    return %1, %c0_i32, %c0_i32_0 : i32, i32, i32
  }
  func.func @transform_1(%arg0: i32, %arg1: memref<8xi32, #tpu.memory_space<smem>>) -> (i32, i32) {
    %c0_i32 = arith.constant 0 : i32
    %c0_i32_0 = arith.constant 0 : i32
    %c0_i32_1 = arith.constant 0 : i32
    return %c0_i32, %c0_i32_0 : i32, i32
  }
  func.func @transform_2(%arg0: i32, %arg1: memref<8xi32, #tpu.memory_space<smem>>) -> (i32, i32) {
    %c0_i32 = arith.constant 0 : i32
    %c0_i32_0 = arith.constant 0 : i32
    %c0_i32_1 = arith.constant 0 : i32
    return %c0_i32, %c0_i32_0 : i32, i32
  }
  func.func @transform_3(%arg0: i32, %arg1: memref<8xi32, #tpu.memory_space<smem>>) -> (i32, i32) {
    %c0_i32 = arith.constant 0 : i32
    %c0_i32_0 = arith.constant 0 : i32
    %c0_i32_1 = arith.constant 0 : i32
    return %c0_i32, %c0_i32_0 : i32, i32
  }
  func.func @transform_4(%arg0: i32, %arg1: memref<8xi32, #tpu.memory_space<smem>>) -> (i32, i32) {
    %c0_i32 = arith.constant 0 : i32
    %c0_i32_0 = arith.constant 0 : i32
    %c0_i32_1 = arith.constant 0 : i32
    return %c0_i32, %c0_i32_0 : i32, i32
  }
  func.func @transform_5(%arg0: i32, %arg1: memref<8xi32, #tpu.memory_space<smem>>) -> (i32, i32) {
    %c0_i32 = arith.constant 0 : i32
    %c0_i32_0 = arith.constant 0 : i32
    %c0_i32_1 = arith.constant 0 : i32
    return %c0_i32, %c0_i32_0 : i32, i32
  }
  func.func @transform_6(%arg0: i32, %arg1: memref<8xi32, #tpu.memory_space<smem>>) -> (i32, i32, i32) {
    %c0_i32 = arith.constant 0 : i32
    %c0_i32_0 = arith.constant 0 : i32
    %c0_i32_1 = arith.constant 0 : i32
    return %arg0, %c0_i32, %c0_i32_0 : i32, i32, i32
  }
}

</mosaic_0001>

<llo_original>
// kernel: encoder_encode_sequence.1
$region0: #{encoder_encode_sequence.1}
  #allocation0 [shape = 'u32[]', space=smem, size = 0x4, offset = 0x4, fixed_abs, tag = 'smem constant byte address 0x4 - core index']
  #allocation1 [shape = 'u32[144,128]{1,0:T(1,128)}', space=vmem, size = 0x12000, scoped, tag = 'internal scratch']
  #allocation2 [shape = 'f32[1,128]{1,0:T(1,128)}', space=vmem, size = 0x200, scoped, tag = 'scratch operand']
  #allocation3 [shape = 's32[1]{0}', space=sflag, size = 0x4, scoped, tag = 'scoped memory for encoder_encode_sequence.1']
  #allocation4 [shape = 'u8[512]{0}', space=smem, size = 0x200, scoped, tag = 'prefetched SMEM operand 0']
  %s0 = inlined_call_operand.vmem [shape: s32[8], index: 0, kind: input, shape index: {}]
  %s1 = inlined_call_operand.vmem [shape: bf16[64,1,128], index: 1, kind: input, shape index: {}]
  %s2 = inlined_call_operand.vmem [shape: f32[1,128], index: 2, kind: input, shape index: {}]
  %s3 = inlined_call_operand.hbm [shape: bf16[128,384], index: 3, kind: input, shape index: {}]
  %s4 = inlined_call_operand.hbm [shape: bf16[128,384], index: 4, kind: input, shape index: {}]
  %s5 = inlined_call_operand.vmem [shape: f32[1,384], index: 5, kind: input, shape index: {}]
  %s6 = inlined_call_operand.vmem [shape: f32[1,384], index: 6, kind: input, shape index: {}]
  %s7 = inlined_call_operand.vmem [shape: f32[8,1,128], index: 7, kind: output, shape index: {}]
  %s8 = sld [smem:[#allocation0]]
  $region69: #{encoder_encode_sequence.1} parent=0
    _
  %s10 = ssub.s32 1, %s8
  %s11 = scalar_select 0, %s10, %s8
  %s12 = sshll.u32 %s0, 4
  %s13 = int_to_ptr.vmem [resolvable:$true] %s12
  %15 = dma.vmem_to_smem %s13, 16, [#allocation4], [#allocation3]
  %16 = dma.done [#allocation3], 16
  %17 = sfence
  $region1: #{encoder_encode_sequence.1} parent=0
    #allocation5 [shape = 'u8[98304]{0}', space=vmem, size = 0x18000, scoped, tag = 'input window, operand 3, single buffered']
    #allocation6 [shape = 's32[2]{0}', space=sflag, size = 0x8, scoped, tag = 'scoped memory for encoder_encode_sequence.1']
    #allocation7 [shape = 'u8[98304]{0}', space=vmem, size = 0x18000, scoped, tag = 'input window, operand 4, single buffered']
    #allocation8 [shape = 's32[1]{0}', space=sflag, size = 0x4, scoped, tag = 'scoped memory for encoder_encode_sequence.1']
    %18 = vsyncpa [#allocation6], 0
    %19 = vsyncpa [#allocation8], 0
    loop: start=0, step=1, limit=10
    $region2: #{encoder_encode_sequence.1} parent=1 // loop_pre_header
      _
    $region3: #{encoder_encode_sequence.1} parent=1 // loop_header
      %s21 = sphi 0, %s25
      %p22 = scmp.ge.s32.totalorder %s21, 10
      %s33 = sphi 0, %s35
      %s36 = sphi 0, %s33
      %s37 = sphi 0, %s36
      %s53 = sphi 0, %s37
      %s57 = sphi 0, %s57
      %s59 = sphi 0, %s57
      %s60 = sphi 0, %s59
      %s74 = sphi 0, %s60
      %s78 = sphi 0, %s78
      %s80 = sphi 0, %s78
      %s81 = sphi 0, %s80
      %s95 = sphi 0, %s81
      %s99 = sphi 0, %s99
      %s101 = sphi 0, %s99
      %s102 = sphi 0, %s101
      %s116 = sphi 0, %s102
      %s120 = sphi 0, %s120
      %s122 = sphi 0, %s120
      %s123 = sphi 0, %s122
      %s137 = sphi 0, %s123
      %s141 = sphi 0, %s141
      %s143 = sphi 0, %s141
      %s144 = sphi 0, %s143
      %s158 = sphi 0, %s144
      %s164 = sphi 0, %s166
      %s167 = sphi 0, %s164
      %s168 = sphi 0, %s167
      %s184 = sphi 0, %s168
    $region4: #{encoder_encode_sequence.1} parent=1 // loop_header_branch
      %24 = sbr.rel (%p22) target = $region8
    $region5: #{encoder_encode_sequence.1} parent=1 // loop_body
      %s26 = ssub.s32 %s21, 1
      %s27 = ssub.s32 %s21, 2
      %s28 = sadd.s32 %s21, 1
      %s29 = sld [smem:[#allocation4 + %s21]]
      %s30 = sld [smem:[#allocation4 + %s28]]
      %s31 = ssub.s32 %s29, %s30
      %p32 = scmp.eq.s32.totalorder %s31, 0
      %s34 = sadd.s32 %s33, 1
      %s35 = scalar_select %p32, %s33, %s34
      %p38 = pneg %p32
      %p39 = scmp.eq.s32.totalorder %s21, 7
      %p40 = por %p38, %p39
      %p41 = scmp.ne.s32.totalorder %s33, %s36
      %p42 = scmp.eq.s32.totalorder %s21, 0
      %p43 = por %p41, %p42
      %p44 = scmp.ne.s32.totalorder %s33, %s36
      %p45 = scmp.eq.s32.totalorder %s26, 7
      %p46 = por %p44, %p45
      %p47 = scmp.ne.s32.totalorder %s36, %s37
      %p48 = scmp.eq.s32.totalorder %s26, 0
      %p49 = por %p47, %p48
      %p50 = scmp.ne.s32.totalorder %s36, %s37
      %p51 = scmp.eq.s32.totalorder %s27, 7
      %p52 = por %p50, %p51
      %p54 = scmp.ne.s32.totalorder %s37, %s53
      %p55 = scmp.eq.s32.totalorder %s27, 0
      %p56 = por %p54, %p55
      %s58 = sadd.s32 %s57, 1
      %p61 = scmp.eq.s32.totalorder %s21, 7
      %p62 = scmp.ne.s32.totalorder %s57, %s59
      %p63 = scmp.eq.s32.totalorder %s21, 0
      %p64 = por %p62, %p63
      %p65 = scmp.ne.s32.totalorder %s57, %s59
      %p66 = scmp.eq.s32.totalorder %s26, 7
      %p67 = por %p65, %p66
      %p68 = scmp.ne.s32.totalorder %s59, %s60
      %p69 = scmp.eq.s32.totalorder %s26, 0
      %p70 = por %p68, %p69
      %p71 = scmp.ne.s32.totalorder %s59, %s60
      %p72 = scmp.eq.s32.totalorder %s27, 7
      %p73 = por %p71, %p72
      %p75 = scmp.ne.s32.totalorder %s60, %s74
      %p76 = scmp.eq.s32.totalorder %s27, 0
      %p77 = por %p75, %p76
      %s79 = sadd.s32 %s78, 1
      %p82 = scmp.eq.s32.totalorder %s21, 7
      %p83 = scmp.ne.s32.totalorder %s78, %s80
      %p84 = scmp.eq.s32.totalorder %s21, 0
      %p85 = por %p83, %p84
      %p86 = scmp.ne.s32.totalorder %s78, %s80
      %p87 = scmp.eq.s32.totalorder %s26, 7
      %p88 = por %p86, %p87
      %p89 = scmp.ne.s32.totalorder %s80, %s81
      %p90 = scmp.eq.s32.totalorder %s26, 0
      %p91 = por %p89, %p90
      %p92 = scmp.ne.s32.totalorder %s80, %s81
      %p93 = scmp.eq.s32.totalorder %s27, 7
      %p94 = por %p92, %p93
      %p96 = scmp.ne.s32.totalorder %s81, %s95
      %p97 = scmp.eq.s32.totalorder %s27, 0
      %p98 = por %p96, %p97
      %s100 = sadd.s32 %s99, 1
      %p103 = scmp.eq.s32.totalorder %s21, 7
      %p104 = scmp.ne.s32.totalorder %s99, %s101
      %p105 = scmp.eq.s32.totalorder %s21, 0
      %p106 = por %p104, %p105
      %p107 = scmp.ne.s32.totalorder %s99, %s101
      %p108 = scmp.eq.s32.totalorder %s26, 7
      %p109 = por %p107, %p108
      %p110 = scmp.ne.s32.totalorder %s101, %s102
      %p111 = scmp.eq.s32.totalorder %s26, 0
      %p112 = por %p110, %p111
      %p113 = scmp.ne.s32.totalorder %s101, %s102
      %p114 = scmp.eq.s32.totalorder %s27, 7
      %p115 = por %p113, %p114
      %p117 = scmp.ne.s32.totalorder %s102, %s116
      %p118 = scmp.eq.s32.totalorder %s27, 0
      %p119 = por %p117, %p118
      %s121 = sadd.s32 %s120, 1
      %p124 = scmp.eq.s32.totalorder %s21, 7
      %p125 = scmp.ne.s32.totalorder %s120, %s122
      %p126 = scmp.eq.s32.totalorder %s21, 0
      %p127 = por %p125, %p126
      %p128 = scmp.ne.s32.totalorder %s120, %s122
      %p129 = scmp.eq.s32.totalorder %s26, 7
      %p130 = por %p128, %p129
      %p131 = scmp.ne.s32.totalorder %s122, %s123
      %p132 = scmp.eq.s32.totalorder %s26, 0
      %p133 = por %p131, %p132
      %p134 = scmp.ne.s32.totalorder %s122, %s123
      %p135 = scmp.eq.s32.totalorder %s27, 7
      %p136 = por %p134, %p135
      %p138 = scmp.ne.s32.totalorder %s123, %s137
      %p139 = scmp.eq.s32.totalorder %s27, 0
      %p140 = por %p138, %p139
      %s142 = sadd.s32 %s141, 1
      %p145 = scmp.eq.s32.totalorder %s21, 7
      %p146 = scmp.ne.s32.totalorder %s141, %s143
      %p147 = scmp.eq.s32.totalorder %s21, 0
      %p148 = por %p146, %p147
      %p149 = scmp.ne.s32.totalorder %s141, %s143
      %p150 = scmp.eq.s32.totalorder %s26, 7
      %p151 = por %p149, %p150
      %p152 = scmp.ne.s32.totalorder %s143, %s144
      %p153 = scmp.eq.s32.totalorder %s26, 0
      %p154 = por %p152, %p153
      %p155 = scmp.ne.s32.totalorder %s143, %s144
      %p156 = scmp.eq.s32.totalorder %s27, 7
      %p157 = por %p155, %p156
      %p159 = scmp.ne.s32.totalorder %s144, %s158
      %p160 = scmp.eq.s32.totalorder %s27, 0
      %p161 = por %p159, %p160
      %s162 = ssub.s32 %s21, %s28
      %p163 = scmp.eq.s32.totalorder %s162, 0
      %s165 = sadd.s32 %s164, 1
      %s166 = scalar_select %p163, %s164, %s165
      %p169 = pneg %p163
      %p170 = scmp.eq.s32.totalorder %s21, 7
      %p171 = por %p169, %p170
      %p172 = scmp.ne.s32.totalorder %s164, %s167
      %p173 = scmp.eq.s32.totalorder %s21, 0
      %p174 = por %p172, %p173
      %p175 = scmp.ne.s32.totalorder %s164, %s167
      %p176 = scmp.eq.s32.totalorder %s26, 7
      %p177 = por %p175, %p176
      %p178 = scmp.ne.s32.totalorder %s167, %s168
      %p179 = scmp.eq.s32.totalorder %s26, 0
      %p180 = por %p178, %p179
      %p181 = scmp.ne.s32.totalorder %s167, %s168
      %p182 = scmp.eq.s32.totalorder %s27, 7
      %p183 = por %p181, %p182
      %p185 = scmp.ne.s32.totalorder %s168, %s184
      %p186 = scmp.eq.s32.totalorder %s27, 0
      %p187 = por %p185, %p186
      %p188 = scmp.le.s32.totalorder 1, %s21
      %p189 = scmp.lt.s32.totalorder %s21, 9
      %p190 = pnand %p188, %p189
      %p191 = pneg %p190
      // Predicated region
      $region9: #{encoder_encode_sequence.1} parent=5 // pred_check
        _
      $region10: #{encoder_encode_sequence.1} parent=5 // pred_check_branch
        %193 = sbr.rel (%p190) target = $region12
      $region11: #{encoder_encode_sequence.1} parent=5 // pred_region
        %s194 = ssub.s32 %s21, 1
        // Predicated region
        $region13: #{encoder_encode_sequence.1} parent=11 // pred_check
          %p195 = pneg %p70
        $region14: #{encoder_encode_sequence.1} parent=11 // pred_check_branch
          %197 = sbr.rel (%p195) target = $region16
        $region15: #{encoder_encode_sequence.1} parent=11 // pred_region
          _
        $region16: #{encoder_encode_sequence.1} parent=11 // pred_fallthru
          _
        // Predicated region
        $region17: #{encoder_encode_sequence.1} parent=11 // pred_check
          %p198 = pneg %p91
        $region18: #{encoder_encode_sequence.1} parent=11 // pred_check_branch
          %200 = sbr.rel (%p198) target = $region20
        $region19: #{encoder_encode_sequence.1} parent=11 // pred_region
          %s202 = ssub.s32 3072, 3072
          %203 = vsyncadd [#allocation6], %s202
          %s204 = sshll.u32 [#allocation5], 4
          %s205 = int_to_ptr.vmem [resolvable:$true] %s204
          %210 = dma.hbm_to_vmem [thread:$0]  %s3, 3072, %s205, [#allocation6], 192, 192, 12
        $region20: #{encoder_encode_sequence.1} parent=11 // pred_fallthru
          _
        // Predicated region
        $region21: #{encoder_encode_sequence.1} parent=11 // pred_check
          %p211 = pneg %p112
        $region22: #{encoder_encode_sequence.1} parent=11 // pred_check_branch
          %213 = sbr.rel (%p211) target = $region24
        $region23: #{encoder_encode_sequence.1} parent=11 // pred_region
          %s215 = ssub.s32 3072, 3072
          %216 = vsyncadd [#allocation8], %s215
          %s217 = sshll.u32 [#allocation7], 4
          %s218 = int_to_ptr.vmem [resolvable:$true] %s217
          %223 = dma.hbm_to_vmem [thread:$0]  %s4, 3072, %s218, [#allocation8], 192, 192, 12
        $region24: #{encoder_encode_sequence.1} parent=11 // pred_fallthru
          _
        // Predicated region
        $region25: #{encoder_encode_sequence.1} parent=11 // pred_check
          %p224 = pneg %p133
        $region26: #{encoder_encode_sequence.1} parent=11 // pred_check_branch
          %226 = sbr.rel (%p224) target = $region28
        $region27: #{encoder_encode_sequence.1} parent=11 // pred_region
          _
        $region28: #{encoder_encode_sequence.1} parent=11 // pred_fallthru
          _
        // Predicated region
        $region29: #{encoder_encode_sequence.1} parent=11 // pred_check
          %p227 = pneg %p154
        $region30: #{encoder_encode_sequence.1} parent=11 // pred_check_branch
          %229 = sbr.rel (%p227) target = $region32
        $region31: #{encoder_encode_sequence.1} parent=11 // pred_region
          _
        $region32: #{encoder_encode_sequence.1} parent=11 // pred_fallthru
          _
      $region12: #{encoder_encode_sequence.1} parent=5 // pred_fallthru
        _
      %p230 = scmp.lt.s32.totalorder %s21, 8
      // Predicated region
      $region33: #{encoder_encode_sequence.1} parent=5 // pred_check
        %p231 = pneg %p230
      $region34: #{encoder_encode_sequence.1} parent=5 // pred_check_branch
        %233 = sbr.rel (%p231) target = $region36
      $region35: #{encoder_encode_sequence.1} parent=5 // pred_region
        // Predicated region
        $region37: #{encoder_encode_sequence.1} parent=35 // pred_check
          %p234 = pneg %p43
        $region38: #{encoder_encode_sequence.1} parent=35 // pred_check_branch
          %236 = sbr.rel (%p234) target = $region40
        $region39: #{encoder_encode_sequence.1} parent=35 // pred_region
          %s237 = sld [smem:[#allocation4 + %s21]]
          %p238 = scmp.lt.s32.totalorder %s237, 63
          %s239 = scalar_select %p238, %s237, 63
          %s240 = scalar_lea.vmem %s1, %s239
          %s241 = sld [smem:[#allocation4 + %s21]]
        $region40: #{encoder_encode_sequence.1} parent=35 // pred_fallthru
          _
      $region36: #{encoder_encode_sequence.1} parent=5 // pred_fallthru
        _
      %p242 = scmp.le.s32.totalorder 1, %s21
      %p243 = scmp.lt.s32.totalorder %s21, 9
      %p244 = pnand %p242, %p243
      %p245 = pneg %p244
      // Predicated region
      $region41: #{encoder_encode_sequence.1} parent=5 // pred_check
        _
      $region42: #{encoder_encode_sequence.1} parent=5 // pred_check_branch
        %247 = sbr.rel (%p244) target = $region44
      $region43: #{encoder_encode_sequence.1} parent=5 // pred_region
        %s248 = ssub.s32 %s21, 1
        // Predicated region
        $region45: #{encoder_encode_sequence.1} parent=43 // pred_check
          %p249 = pneg %p91
        $region46: #{encoder_encode_sequence.1} parent=43 // pred_check_branch
          %251 = sbr.rel (%p249) target = $region48
        $region47: #{encoder_encode_sequence.1} parent=43 // pred_region
          %252 = dma.done [#allocation6], 3072
        $region48: #{encoder_encode_sequence.1} parent=43 // pred_fallthru
          _
        // Predicated region
        $region49: #{encoder_encode_sequence.1} parent=43 // pred_check
          %p253 = pneg %p112
        $region50: #{encoder_encode_sequence.1} parent=43 // pred_check_branch
          %255 = sbr.rel (%p253) target = $region52
        $region51: #{encoder_encode_sequence.1} parent=43 // pred_region
          %256 = dma.done [#allocation8], 3072
        $region52: #{encoder_encode_sequence.1} parent=43 // pred_fallthru
          _
        %s257 = sld [smem:[#allocation4 + %s26]]
        %p258 = scmp.lt.s32.totalorder %s257, 63
        %s259 = scalar_select %p258, %s257, 63
        %s260 = scalar_lea.vmem %s1, %s259
        %p261 = pneg %p49
        %p262 = pneg %p46
        %p263 = pneg %p70
        %p264 = pneg %p67
        %p265 = pneg %p91
        %p266 = pneg %p88
        %p267 = pneg %p112
        %p268 = pneg %p109
        %p269 = pneg %p133
        %p270 = pneg %p130
        %p271 = pneg %p154
        %p272 = pneg %p151
        %p273 = pneg %p180
        %p274 = pneg %p177
        %p275 = scmp.lt.s32.totalorder %s26, 7
        %s276 = scalar_select %p275, %s26, 7
        %s277 = scalar_lea.vmem %s7, %s276
        %s278 = sld [smem:[#allocation4 + %s26]]
        %p279 = scmp.lt.s32.totalorder %s278, 63
        %s280 = scalar_select %p279, %s278, 63
        %s281 = scalar_lea.vmem %s1, %s280
        %s282 = sld [smem:[#allocation4 + %s26]]
        %p283 = scmp.lt.s32.totalorder %s26, 7
        %s284 = scalar_select %p283, %s26, 7
        %s285 = scalar_lea.vmem %s7, %s284
        %p287 = scmp.eq.s32.totalorder %s26, 0
        // Predicated region
        $region53: #{encoder_encode_sequence.1} parent=43 // pred_check
          %p288 = pneg %p287
        $region54: #{encoder_encode_sequence.1} parent=43 // pred_check_branch
          %290 = sbr.rel (%p288) target = $region56
        $region55: #{encoder_encode_sequence.1} parent=43 // pred_region
          %v291 = vld [vmem:[%s2] sm:$0x1]
          %292 = vst [vmem:[#allocation2] sm:$0x1] %v291
        $region56: #{encoder_encode_sequence.1} parent=43 // pred_fallthru
          _
        %v293 = vld [vmem:[%s281] sm:$0x1]
        %v294 = vld [vmem:[#allocation2] sm:$0x1]
        %v295 = vld [vmem:[#allocation5] sm:$0xff]
        %v296 = vld [vmem:[#allocation5 + $0x8] sm:$0xf]
        %v297 = vld [vmem:[#allocation5 + $0xc] sm:$0xff]
        %v298 = vld [vmem:[#allocation5 + $0x14] sm:$0xf]
        %v299 = vld [vmem:[#allocation5 + $0x18] sm:$0xff]
        %v300 = vld [vmem:[#allocation5 + $0x20] sm:$0xf]
        %v301 = vld [vmem:[#allocation5 + $0x24] sm:$0xff]
        %v302 = vld [vmem:[#allocation5 + $0x2c] sm:$0xf]
        %v303 = vld [vmem:[#allocation5 + $0x30] sm:$0xff]
        %v304 = vld [vmem:[#allocation5 + $0x38] sm:$0xf]
        %v305 = vld [vmem:[#allocation5 + $0x3c] sm:$0xff]
        %v306 = vld [vmem:[#allocation5 + $0x44] sm:$0xf]
        %v307 = vld [vmem:[#allocation5 + $0x48] sm:$0xff]
        %v308 = vld [vmem:[#allocation5 + $0x50] sm:$0xf]
        %v309 = vld [vmem:[#allocation5 + $0x54] sm:$0xff]
        %v310 = vld [vmem:[#allocation5 + $0x5c] sm:$0xf]
        %v311 = vld [vmem:[#allocation5 + $0x60] sm:$0xff]
        %v312 = vld [vmem:[#allocation5 + $0x68] sm:$0xf]
        %v313 = vld [vmem:[#allocation5 + $0x6c] sm:$0xff]
        %v314 = vld [vmem:[#allocation5 + $0x74] sm:$0xf]
        %v315 = vld [vmem:[#allocation5 + $0x78] sm:$0xff]
        %v316 = vld [vmem:[#allocation5 + $0x80] sm:$0xf]
        %v317 = vld [vmem:[#allocation5 + $0x84] sm:$0xff]
        %v318 = vld [vmem:[#allocation5 + $0x8c] sm:$0xf]
        %v319 = vld [vmem:[#allocation5 + $0x90] sm:$0xff]
        %v320 = vld [vmem:[#allocation5 + $0x98] sm:$0xf]
        %v321 = vld [vmem:[#allocation5 + $0x9c] sm:$0xff]
        %v322 = vld [vmem:[#allocation5 + $0xa4] sm:$0xf]
        %v323 = vld [vmem:[#allocation5 + $0xa8] sm:$0xff]
        %v324 = vld [vmem:[#allocation5 + $0xb0] sm:$0xf]
        %v325 = vld [vmem:[#allocation5 + $0xb4] sm:$0xff]
        %v326 = vld [vmem:[#allocation5 + $0xbc] sm:$0xf]
        %v327 = vld [vmem:[%s5] sm:$0x7]
        %v360 = vunpack.c.l.b16 %v295
        %v361 = vunpack.c.h.b16 %v295
        %v362 = vunpack.c.l.b16 %v296
        %v363 = vunpack.c.l.b16 %v297
        %v364 = vunpack.c.h.b16 %v297
        %v365 = vunpack.c.l.b16 %v298
        %v366 = vunpack.c.l.b16 %v299
        %v367 = vunpack.c.h.b16 %v299
        %v368 = vunpack.c.l.b16 %v300
        %v369 = vunpack.c.l.b16 %v301
        %v370 = vunpack.c.h.b16 %v301
        %v371 = vunpack.c.l.b16 %v302
        %v372 = vunpack.c.l.b16 %v303
        %v373 = vunpack.c.h.b16 %v303
        %v374 = vunpack.c.l.b16 %v304
        %v375 = vunpack.c.l.b16 %v305
        %v376 = vunpack.c.h.b16 %v305
        %v377 = vunpack.c.l.b16 %v306
        %v378 = vunpack.c.l.b16 %v307
        %v379 = vunpack.c.h.b16 %v307
        %v380 = vunpack.c.l.b16 %v308
        %v381 = vunpack.c.l.b16 %v309
        %v382 = vunpack.c.h.b16 %v309
        %v383 = vunpack.c.l.b16 %v310
        %v384 = vunpack.c.l.b16 %v311
        %v385 = vunpack.c.h.b16 %v311
        %v386 = vunpack.c.l.b16 %v312
        %v387 = vunpack.c.l.b16 %v313
        %v388 = vunpack.c.h.b16 %v313
        %v389 = vunpack.c.l.b16 %v314
        %v390 = vunpack.c.l.b16 %v315
        %v391 = vunpack.c.h.b16 %v315
        %v392 = vunpack.c.l.b16 %v316
        %v393 = vunpack.c.l.b16 %v317
        %v394 = vunpack.c.h.b16 %v317
        %v395 = vunpack.c.l.b16 %v318
        %v396 = vunpack.c.l.b16 %v319
        %v397 = vunpack.c.h.b16 %v319
        %v398 = vunpack.c.l.b16 %v320
        %v399 = vunpack.c.l.b16 %v321
        %v400 = vunpack.c.h.b16 %v321
        %v401 = vunpack.c.l.b16 %v322
        %v402 = vunpack.c.l.b16 %v323
        %v403 = vunpack.c.h.b16 %v323
        %v404 = vunpack.c.l.b16 %v324
        %v405 = vunpack.c.l.b16 %v325
        %v406 = vunpack.c.h.b16 %v325
        %v407 = vunpack.c.l.b16 %v326
        %v408 = vpack.c.b16 %v363, %v360
        %v409 = vpack.c.b16 %v364, %v361
        %v410 = vpack.c.b16 %v365, %v362
        %v411 = vpack.c.b16 %v369, %v366
        %v412 = vpack.c.b16 %v370, %v367
        %v413 = vpack.c.b16 %v371, %v368
        %v414 = vpack.c.b16 %v375, %v372
        %v415 = vpack.c.b16 %v376, %v373
        %v416 = vpack.c.b16 %v377, %v374
        %v417 = vpack.c.b16 %v381, %v378
        %v418 = vpack.c.b16 %v382, %v379
        %v419 = vpack.c.b16 %v383, %v380
        %v420 = vpack.c.b16 %v387, %v384
        %v421 = vpack.c.b16 %v388, %v385
        %v422 = vpack.c.b16 %v389, %v386
        %v423 = vpack.c.b16 %v393, %v390
        %v424 = vpack.c.b16 %v394, %v391
        %v425 = vpack.c.b16 %v395, %v392
        %v426 = vpack.c.b16 %v399, %v396
        %v427 = vpack.c.b16 %v400, %v397
        %v428 = vpack.c.b16 %v401, %v398
        %v429 = vpack.c.b16 %v405, %v402
        %v430 = vpack.c.b16 %v406, %v403
        %v431 = vpack.c.b16 %v407, %v404
        %v457 = vlaneseq
        %v458 = vshrl.u32 %v457, 7
        %v459 = vsub.s32 0, %v458
        %v460 = vrot.slane %v327, %v459
        %v461 = vlaneseq
        %v462 = vshrl.u32 %v461, 7
        %v463 = vsub.s32 1, %v462
        %v464 = vrot.slane %v327, %v463
        %v465 = vlaneseq
        %v466 = vshrl.u32 %v465, 7
        %v467 = vsub.s32 2, %v466
        %v468 = vrot.slane %v327, %v467
        %472 = vmatprep.subr.bf16.mxu0 %v430
        %473 = vmatpush1.bf16.msra.mxu0 %v429
        %474 = vmatprep.subr.bf16.mxu0 %v427
        %475 = vmatpush1.bf16.msra.mxu0 %v426
        %476 = vmatprep.subr.bf16.mxu0 %v424
        %477 = vmatpush1.bf16.msra.mxu0 %v423
        %478 = vmatprep.subr.bf16.mxu0 %v421
        %479 = vmatpush1.bf16.msra.mxu0 %v420
        %480 = vmatprep.subr.bf16.mxu0 %v418
        %481 = vmatpush1.bf16.msra.mxu0 %v417
        %482 = vmatprep.subr.bf16.mxu0 %v415
        %483 = vmatpush1.bf16.msra.mxu0 %v414
        %484 = vmatprep.subr.bf16.mxu0 %v412
        %485 = vmatpush1.bf16.msra.mxu0 %v411
        %486 = vmatprep.subr.bf16.mxu0 %v409
        %487 = vmatpush1.bf16.msra.mxu0 %v408
        %488 = vmatprep.subr.bf16.mxu0 0
        %489 = vmatpush2.bf16.msra.mxu0 0
        %490 = vmatprep.subr.bf16.mxu0 0
        %491 = vmatpush2.bf16.msra.mxu0 0
        %492 = vmatprep.subr.bf16.mxu0 0
        %493 = vmatpush2.bf16.msra.mxu0 0
        %494 = vmatprep.subr.bf16.mxu0 0
        %495 = vmatpush2.bf16.msra.mxu0 0
        %496 = vmatprep.subr.bf16.mxu0 0
        %497 = vmatpush2.bf16.msra.mxu0 0
        %498 = vmatprep.subr.bf16.mxu0 0
        %499 = vmatpush2.bf16.msra.mxu0 0
        %500 = vmatprep.subr.bf16.mxu0 0
        %501 = vmatpush2.bf16.msra.mxu0 0
        %502 = vmatprep.subr.bf16.mxu0 0
        %503 = vmatpush2.bf16.msra.mxu0 0
        %504 = vmatprep.mubr.bf16.mxu0 0
        %505 = vmatmul.mubr.bf16.gmra.mxu0 %v293
        %v506 = vpop.f32.mrf.mxu0
        %v507 = vadd.f32 %v460, %v506
        %v508 = vpop.f32.mrf.mxu0
        %v509 = vadd.f32 %v464, %v508
        %v510 = vpop.f32.mrf.mxu0
        %v511 = vpop.f32.mrf.mxu0
        %512 = vdwg.mxu0
        %513 = vmatprep.subr.bf16.mxu0 0
        %514 = vmatpush1.bf16.msra.mxu0 %v431
        %515 = vmatprep.subr.bf16.mxu0 0
        %516 = vmatpush1.bf16.msra.mxu0 %v428
        %517 = vmatprep.subr.bf16.mxu0 0
        %518 = vmatpush1.bf16.msra.mxu0 %v425
        %519 = vmatprep.subr.bf16.mxu0 0
        %520 = vmatpush1.bf16.msra.mxu0 %v422
        %521 = vmatprep.subr.bf16.mxu0 0
        %522 = vmatpush1.bf16.msra.mxu0 %v419
        %523 = vmatprep.subr.bf16.mxu0 0
        %524 = vmatpush1.bf16.msra.mxu0 %v416
        %525 = vmatprep.subr.bf16.mxu0 0
        %526 = vmatpush1.bf16.msra.mxu0 %v413
        %527 = vmatprep.subr.bf16.mxu0 0
        %528 = vmatpush1.bf16.msra.mxu0 %v410
        %529 = vmatprep.subr.bf16.mxu0 0
        %530 = vmatpush2.bf16.msra.mxu0 0
        %531 = vmatprep.subr.bf16.mxu0 0
        %532 = vmatpush2.bf16.msra.mxu0 0
        %533 = vmatprep.subr.bf16.mxu0 0
        %534 = vmatpush2.bf16.msra.mxu0 0
        %535 = vmatprep.subr.bf16.mxu0 0
        %536 = vmatpush2.bf16.msra.mxu0 0
        %537 = vmatprep.subr.bf16.mxu0 0
        %538 = vmatpush2.bf16.msra.mxu0 0
        %539 = vmatprep.subr.bf16.mxu0 0
        %540 = vmatpush2.bf16.msra.mxu0 0
        %541 = vmatprep.subr.bf16.mxu0 0
        %542 = vmatpush2.bf16.msra.mxu0 0
        %543 = vmatprep.subr.bf16.mxu0 0
        %544 = vmatpush2.bf16.msra.mxu0 0
        %545 = vmatprep.mubr.bf16.mxu0 0
        %546 = vmatmul.mubr.bf16.gmra.mxu0 %v293
        %v547 = vpop.f32.mrf.mxu0
        %v548 = vadd.f32 %v468, %v547
        %v549 = vpop.f32.mrf.mxu0
        %v550 = vpop.f32.mrf.mxu0
        %v551 = vpop.f32.mrf.mxu0
        %552 = vdwg.mxu0
        %v553 = vpack.c.bf16 %v294, %v294
        %v554 = vld [vmem:[#allocation7] sm:$0xff]
        %v555 = vld [vmem:[#allocation7 + $0x8] sm:$0xf]
        %v556 = vld [vmem:[#allocation7 + $0xc] sm:$0xff]
        %v557 = vld [vmem:[#allocation7 + $0x14] sm:$0xf]
        %v558 = vld [vmem:[#allocation7 + $0x18] sm:$0xff]
        %v559 = vld [vmem:[#allocation7 + $0x20] sm:$0xf]
        %v560 = vld [vmem:[#allocation7 + $0x24] sm:$0xff]
        %v561 = vld [vmem:[#allocation7 + $0x2c] sm:$0xf]
        %v562 = vld [vmem:[#allocation7 + $0x30] sm:$0xff]
        %v563 = vld [vmem:[#allocation7 + $0x38] sm:$0xf]
        %v564 = vld [vmem:[#allocation7 + $0x3c] sm:$0xff]
        %v565 = vld [vmem:[#allocation7 + $0x44] sm:$0xf]
        %v566 = vld [vmem:[#allocation7 + $0x48] sm:$0xff]
        %v567 = vld [vmem:[#allocation7 + $0x50] sm:$0xf]
        %v568 = vld [vmem:[#allocation7 + $0x54] sm:$0xff]
        %v569 = vld [vmem:[#allocation7 + $0x5c] sm:$0xf]
        %v570 = vld [vmem:[#allocation7 + $0x60] sm:$0xff]
        %v571 = vld [vmem:[#allocation7 + $0x68] sm:$0xf]
        %v572 = vld [vmem:[#allocation7 + $0x6c] sm:$0xff]
        %v573 = vld [vmem:[#allocation7 + $0x74] sm:$0xf]
        %v574 = vld [vmem:[#allocation7 + $0x78] sm:$0xff]
        %v575 = vld [vmem:[#allocation7 + $0x80] sm:$0xf]
        %v576 = vld [vmem:[#allocation7 + $0x84] sm:$0xff]
        %v577 = vld [vmem:[#allocation7 + $0x8c] sm:$0xf]
        %v578 = vld [vmem:[#allocation7 + $0x90] sm:$0xff]
        %v579 = vld [vmem:[#allocation7 + $0x98] sm:$0xf]
        %v580 = vld [vmem:[#allocation7 + $0x9c] sm:$0xff]
        %v581 = vld [vmem:[#allocation7 + $0xa4] sm:$0xf]
        %v582 = vld [vmem:[#allocation7 + $0xa8] sm:$0xff]
        %v583 = vld [vmem:[#allocation7 + $0xb0] sm:$0xf]
        %v584 = vld [vmem:[#allocation7 + $0xb4] sm:$0xff]
        %v585 = vld [vmem:[#allocation7 + $0xbc] sm:$0xf]
        %v586 = vld [vmem:[%s6] sm:$0x7]
        %v619 = vunpack.c.l.b16 %v554
        %v620 = vunpack.c.h.b16 %v554
        %v621 = vunpack.c.l.b16 %v555
        %v622 = vunpack.c.l.b16 %v556
        %v623 = vunpack.c.h.b16 %v556
        %v624 = vunpack.c.l.b16 %v557
        %v625 = vunpack.c.l.b16 %v558
        %v626 = vunpack.c.h.b16 %v558
        %v627 = vunpack.c.l.b16 %v559
        %v628 = vunpack.c.l.b16 %v560
        %v629 = vunpack.c.h.b16 %v560
        %v630 = vunpack.c.l.b16 %v561
        %v631 = vunpack.c.l.b16 %v562
        %v632 = vunpack.c.h.b16 %v562
        %v633 = vunpack.c.l.b16 %v563
        %v634 = vunpack.c.l.b16 %v564
        %v635 = vunpack.c.h.b16 %v564
        %v636 = vunpack.c.l.b16 %v565
        %v637 = vunpack.c.l.b16 %v566
        %v638 = vunpack.c.h.b16 %v566
        %v639 = vunpack.c.l.b16 %v567
        %v640 = vunpack.c.l.b16 %v568
        %v641 = vunpack.c.h.b16 %v568
        %v642 = vunpack.c.l.b16 %v569
        %v643 = vunpack.c.l.b16 %v570
        %v644 = vunpack.c.h.b16 %v570
        %v645 = vunpack.c.l.b16 %v571
        %v646 = vunpack.c.l.b16 %v572
        %v647 = vunpack.c.h.b16 %v572
        %v648 = vunpack.c.l.b16 %v573
        %v649 = vunpack.c.l.b16 %v574
        %v650 = vunpack.c.h.b16 %v574
        %v651 = vunpack.c.l.b16 %v575
        %v652 = vunpack.c.l.b16 %v576
        %v653 = vunpack.c.h.b16 %v576
        %v654 = vunpack.c.l.b16 %v577
        %v655 = vunpack.c.l.b16 %v578
        %v656 = vunpack.c.h.b16 %v578
        %v657 = vunpack.c.l.b16 %v579
        %v658 = vunpack.c.l.b16 %v580
        %v659 = vunpack.c.h.b16 %v580
        %v660 = vunpack.c.l.b16 %v581
        %v661 = vunpack.c.l.b16 %v582
        %v662 = vunpack.c.h.b16 %v582
        %v663 = vunpack.c.l.b16 %v583
        %v664 = vunpack.c.l.b16 %v584
        %v665 = vunpack.c.h.b16 %v584
        %v666 = vunpack.c.l.b16 %v585
        %v667 = vpack.c.b16 %v622, %v619
        %v668 = vpack.c.b16 %v623, %v620
        %v669 = vpack.c.b16 %v624, %v621
        %v670 = vpack.c.b16 %v628, %v625
        %v671 = vpack.c.b16 %v629, %v626
        %v672 = vpack.c.b16 %v630, %v627
        %v673 = vpack.c.b16 %v634, %v631
        %v674 = vpack.c.b16 %v635, %v632
        %v675 = vpack.c.b16 %v636, %v633
        %v676 = vpack.c.b16 %v640, %v637
        %v677 = vpack.c.b16 %v641, %v638
        %v678 = vpack.c.b16 %v642, %v639
        %v679 = vpack.c.b16 %v646, %v643
        %v680 = vpack.c.b16 %v647, %v644
        %v681 = vpack.c.b16 %v648, %v645
        %v682 = vpack.c.b16 %v652, %v649
        %v683 = vpack.c.b16 %v653, %v650
        %v684 = vpack.c.b16 %v654, %v651
        %v685 = vpack.c.b16 %v658, %v655
        %v686 = vpack.c.b16 %v659, %v656
        %v687 = vpack.c.b16 %v660, %v657
        %v688 = vpack.c.b16 %v664, %v661
        %v689 = vpack.c.b16 %v665, %v662
        %v690 = vpack.c.b16 %v666, %v663
        %v716 = vlaneseq
        %v717 = vshrl.u32 %v716, 7
        %v718 = vsub.s32 0, %v717
        %v719 = vrot.slane %v586, %v718
        %v720 = vlaneseq
        %v721 = vshrl.u32 %v720, 7
        %v722 = vsub.s32 1, %v721
        %v723 = vrot.slane %v586, %v722
        %v724 = vlaneseq
        %v725 = vshrl.u32 %v724, 7
        %v726 = vsub.s32 2, %v725
        %v727 = vrot.slane %v586, %v726
        %731 = vmatprep.subr.bf16.mxu0 %v689
        %732 = vmatpush1.bf16.msra.mxu0 %v688
        %733 = vmatprep.subr.bf16.mxu0 %v686
        %734 = vmatpush1.bf16.msra.mxu0 %v685
        %735 = vmatprep.subr.bf16.mxu0 %v683
        %736 = vmatpush1.bf16.msra.mxu0 %v682
        %737 = vmatprep.subr.bf16.mxu0 %v680
        %738 = vmatpush1.bf16.msra.mxu0 %v679
        %739 = vmatprep.subr.bf16.mxu0 %v677
        %740 = vmatpush1.bf16.msra.mxu0 %v676
        %741 = vmatprep.subr.bf16.mxu0 %v674
        %742 = vmatpush1.bf16.msra.mxu0 %v673
        %743 = vmatprep.subr.bf16.mxu0 %v671
        %744 = vmatpush1.bf16.msra.mxu0 %v670
        %745 = vmatprep.subr.bf16.mxu0 %v668
        %746 = vmatpush1.bf16.msra.mxu0 %v667
        %747 = vmatprep.subr.bf16.mxu0 0
        %748 = vmatpush2.bf16.msra.mxu0 0
        %749 = vmatprep.subr.bf16.mxu0 0
        %750 = vmatpush2.bf16.msra.mxu0 0
        %751 = vmatprep.subr.bf16.mxu0 0
        %752 = vmatpush2.bf16.msra.mxu0 0
        %753 = vmatprep.subr.bf16.mxu0 0
        %754 = vmatpush2.bf16.msra.mxu0 0
        %755 = vmatprep.subr.bf16.mxu0 0
        %756 = vmatpush2.bf16.msra.mxu0 0
        %757 = vmatprep.subr.bf16.mxu0 0
        %758 = vmatpush2.bf16.msra.mxu0 0
        %759 = vmatprep.subr.bf16.mxu0 0
        %760 = vmatpush2.bf16.msra.mxu0 0
        %761 = vmatprep.subr.bf16.mxu0 0
        %762 = vmatpush2.bf16.msra.mxu0 0
        %763 = vmatprep.mubr.bf16.mxu0 0
        %764 = vmatmul.mubr.bf16.gmra.mxu0 %v553
        %v765 = vpop.f32.mrf.mxu0
        %v766 = vadd.f32 %v719, %v765
        %v767 = vpop.f32.mrf.mxu0
        %v768 = vadd.f32 %v723, %v767
        %v769 = vpop.f32.mrf.mxu0
        %v770 = vpop.f32.mrf.mxu0
        %771 = vdwg.mxu0
        %772 = vmatprep.subr.bf16.mxu0 0
        %773 = vmatpush1.bf16.msra.mxu0 %v690
        %774 = vmatprep.subr.bf16.mxu0 0
        %775 = vmatpush1.bf16.msra.mxu0 %v687
        %776 = vmatprep.subr.bf16.mxu0 0
        %777 = vmatpush1.bf16.msra.mxu0 %v684
        %778 = vmatprep.subr.bf16.mxu0 0
        %779 = vmatpush1.bf16.msra.mxu0 %v681
        %780 = vmatprep.subr.bf16.mxu0 0
        %781 = vmatpush1.bf16.msra.mxu0 %v678
        %782 = vmatprep.subr.bf16.mxu0 0
        %783 = vmatpush1.bf16.msra.mxu0 %v675
        %784 = vmatprep.subr.bf16.mxu0 0
        %785 = vmatpush1.bf16.msra.mxu0 %v672
        %786 = vmatprep.subr.bf16.mxu0 0
        %787 = vmatpush1.bf16.msra.mxu0 %v669
        %788 = vmatprep.subr.bf16.mxu0 0
        %789 = vmatpush2.bf16.msra.mxu0 0
        %790 = vmatprep.subr.bf16.mxu0 0
        %791 = vmatpush2.bf16.msra.mxu0 0
        %792 = vmatprep.subr.bf16.mxu0 0
        %793 = vmatpush2.bf16.msra.mxu0 0
        %794 = vmatprep.subr.bf16.mxu0 0
        %795 = vmatpush2.bf16.msra.mxu0 0
        %796 = vmatprep.subr.bf16.mxu0 0
        %797 = vmatpush2.bf16.msra.mxu0 0
        %798 = vmatprep.subr.bf16.mxu0 0
        %799 = vmatpush2.bf16.msra.mxu0 0
        %800 = vmatprep.subr.bf16.mxu0 0
        %801 = vmatpush2.bf16.msra.mxu0 0
        %802 = vmatprep.subr.bf16.mxu0 0
        %803 = vmatpush2.bf16.msra.mxu0 0
        %804 = vmatprep.mubr.bf16.mxu0 0
        %805 = vmatmul.mubr.bf16.gmra.mxu0 %v553
        %v806 = vpop.f32.mrf.mxu0
        %v807 = vadd.f32 %v727, %v806
        %v808 = vpop.f32.mrf.mxu0
        %v809 = vpop.f32.mrf.mxu0
        %v810 = vpop.f32.mrf.mxu0
        %811 = vdwg.mxu0
        %v812 = vadd.f32 %v507, %v766
        %v813 = vxor.u32 %v812, 2147483648
        %v814 = vmul.f32 %v813, 1.442695
        %v815 = vpow.pop %v814
        %v816 = vadd.f32 %v815, 1.0
        %v817 = vrcp.pop %v816
        %v818 = vmul.f32 1.0, %v817
        %v819 = vadd.f32 %v509, %v768
        %v820 = vxor.u32 %v819, 2147483648
        %v821 = vmul.f32 %v820, 1.442695
        %v822 = vpow.pop %v821
        %v823 = vadd.f32 %v822, 1.0
        %v824 = vrcp.pop %v823
        %v825 = vmul.f32 1.0, %v824
        %v826 = vmul.f32 %v818, %v807
        %v827 = vadd.f32 %v548, %v826
        %v828 = vtanh.pop %v827
        %v829 = vsub.f32 1.0, %v825
        %v830 = vmul.f32 %v829, %v828
        %v831 = vmul.f32 %v825, %v294
        %v832 = vadd.f32 %v830, %v831
        %833 = vst [vmem:[#allocation2] sm:$0x1] %v832
        %834 = vst [vmem:[%s285] sm:$0x1] %v832
        %p835 = scmp.lt.s32.totalorder %s26, 7
        %s836 = scalar_select %p835, %s26, 7
        %s837 = scalar_lea.vmem %s7, %s836
        // Predicated region
        $region57: #{encoder_encode_sequence.1} parent=43 // pred_check
          %p838 = pneg %p177
        $region58: #{encoder_encode_sequence.1} parent=43 // pred_check_branch
          %840 = sbr.rel (%p838) target = $region60
        $region59: #{encoder_encode_sequence.1} parent=43 // pred_region
          _
        $region60: #{encoder_encode_sequence.1} parent=43 // pred_fallthru
          _
      $region44: #{encoder_encode_sequence.1} parent=5 // pred_fallthru
        _
      %p841 = scmp.le.s32.totalorder 2, %s21
      // Predicated region
      $region61: #{encoder_encode_sequence.1} parent=5 // pred_check
        %p842 = pneg %p841
      $region62: #{encoder_encode_sequence.1} parent=5 // pred_check_branch
        %844 = sbr.rel (%p842) target = $region64
      $region63: #{encoder_encode_sequence.1} parent=5 // pred_region
        %s845 = ssub.s32 %s21, 2
        // Predicated region
        $region65: #{encoder_encode_sequence.1} parent=63 // pred_check
          %p846 = pneg %p183
        $region66: #{encoder_encode_sequence.1} parent=63 // pred_check_branch
          %848 = sbr.rel (%p846) target = $region68
        $region67: #{encoder_encode_sequence.1} parent=63 // pred_region
          %p849 = scmp.lt.s32.totalorder %s27, 7
          %s850 = scalar_select %p849, %s27, 7
          %s851 = scalar_lea.vmem %s7, %s850
        $region68: #{encoder_encode_sequence.1} parent=63 // pred_fallthru
          _
      $region64: #{encoder_encode_sequence.1} parent=5 // pred_fallthru
        _
    $region6: #{encoder_encode_sequence.1} parent=1 // loop_footer
      %s25 = sadd.s32 1, %s21
    $region7: #{encoder_encode_sequence.1} parent=1 // loop_footer_branch
      %20 = sbr.rel target = $region3
    $region8: #{encoder_encode_sequence.1} parent=1 // loop_exit
      _
    %852 = vsyncpa [#allocation6], 1
    %s853 = scalar_lea.sflag [#allocation6], 1
    %854 = vsyncpa %s853, 1
    %855 = vsyncpa [#allocation8], 1

</llo_original>
